<compile_context>
chip_gen: v6e
topology: v6e:2x2x1
jax: 0.10.0
libtpu: 0.0.40
codegen_flags: <defaults>
</compile_context>

<pallas_src>
import functools

import jax
import jax.numpy as jnp
from jax import lax
from jax.experimental import pallas as pl
from jax.experimental.pallas import tpu as pltpu


def _round_up(a, m):
    return (a + m - 1) // m * m


def _conv_tile(xc_ref, xn_ref, w_ref, *, k_size, stride, t_tile, per_tap):
    """One (Cout_pad, t_tile) conv tile on the MXU.

    xc_ref: (1, Cin, Tblk)    current input block (Tblk = t_tile * stride)
    xn_ref: (1, Cin, 128)     halo block (only max(K-stride,0) cols are read)
    w_ref:  (Cout_pad, K*Cin) weights with taps folded into the contraction
    Returns f32 (Cout_pad, t_tile).
    """
    cur = xc_ref[0]                       # (Cin, Tblk)
    cin = cur.shape[0]
    extra = max(k_size - stride, 0)       # halo columns actually needed

    if per_tap:
        # Deep-channel path (stride == 1): K accumulating dots, contraction
        # depth = Cin; avoids materializing the (K*Cin, Tt) unfold buffer.
        halo = xn_ref[0]                  # (Cin, 128)
        acc = jnp.dot(w_ref[:, :cin], cur, preferred_element_type=jnp.float32)
        for k in range(1, k_size):
            tap = jnp.concatenate([cur[:, k:], halo[:, :k]], axis=1)
            acc += jnp.dot(w_ref[:, k * cin:(k + 1) * cin], tap,
                           preferred_element_type=jnp.float32)
        return acc

    # Small-channel path: fold the K taps into one deep contraction.
    if extra > 0:
        win = jnp.concatenate([cur, xn_ref[0, :, :extra]], axis=1)
    else:
        win = cur
    taps = []
    for kk in range(k_size):              # K is small & static -> unrolled
        if stride == 1:
            taps.append(win[:, kk:kk + t_tile])
        else:
            taps.append(lax.slice(win, (0, kk),
                                  (cin, kk + (t_tile - 1) * stride + 1),
                                  (1, stride)))
    xunf = jnp.concatenate(taps, axis=0) if k_size > 1 else taps[0]
    return jnp.dot(w_ref[...], xunf, preferred_element_type=jnp.float32)


def _stats_kernel(xc_ref, xn_ref, w_ref, b_ref, st_ref, *,
                  k_size, stride, t_tile, tout, per_tap):
    """Sweep 1: per-tile sum / sum-of-squares of the conv output."""
    acc = _conv_tile(xc_ref, xn_ref, w_ref, k_size=k_size, stride=stride,
                     t_tile=t_tile, per_tap=per_tap)
    acc = acc + b_ref[...]                               # (Cout_pad, Tt)

    # Padded Cout rows are exactly zero (zero weight rows + zero bias) so no
    # row mask is needed; column mask only when the grid over-covers Tout.
    if tout % t_tile != 0:
        col = lax.broadcasted_iota(jnp.int32, acc.shape, 1)
        acc = jnp.where(col + pl.program_id(1) * t_tile < tout, acc, 0.0)

    s = jnp.sum(acc)
    ss = jnp.sum(acc * acc)
    # Store the two partial scalars into a lane-dense (8, 128) output tile.
    r8 = lax.broadcasted_iota(jnp.int32, (8, 128), 0)
    c128 = lax.broadcasted_iota(jnp.int32, (8, 128), 1)
    st_ref[0] = jnp.where((r8 == 0) & (c128 == 0), s,
                          jnp.where((r8 == 0) & (c128 == 1), ss, 0.0))


def _apply_kernel(xc_ref, xn_ref, w_ref, scale_ref, shift_ref, a_ref, o_ref, *,
                  k_size, stride, t_tile, per_tap):
    """Sweep 2: conv tile -> per-(batch,channel) affine (GlobLN folded) -> PReLU."""
    acc = _conv_tile(xc_ref, xn_ref, w_ref, k_size=k_size, stride=stride,
                     t_tile=t_tile, per_tap=per_tap)
    # Post-matmul elementwise math stays in f32 (v5e VPU/EUP have no bf16 path).
    y = scale_ref[0] * acc + shift_ref[0]                # (Cout_pad, Tt)
    alpha = a_ref[...]                                   # (Cout_pad, 1)
    o_ref[0] = jnp.where(y > 0, y, alpha * y).astype(o_ref.dtype)


def conv_norm_act(x, weight, bias, gamma, beta, prelu_alpha, *, stride=1,
                  t_tile=512, compute_dtype=jnp.float32, per_tap=None):
    """Conv1d(pad=(K-1)//2, groups=1, bias) + GlobLN + PReLU.

    x: (B, Cin, T), weight: (Cout, Cin, K). Returns (B, Cout, Tout).
    `compute_dtype=jnp.bfloat16` is the recommended setting on v6e/v7x
    (f32 MXU accumulation, f32 post-matmul math).
    """
    B, Cin, T = x.shape
    Cout, Cin_w, K = weight.shape
    assert Cin_w == Cin, "groups != 1 is not supported"
    pad = (K - 1) // 2
    Tout = (T + 2 * pad - K) // stride + 1
    assert Tout > 0
    assert max(K - stride, 0) <= 128, "halo block is only 128 columns wide"

    if per_tap is None:
        per_tap = (stride == 1 and K > 1 and Cin >= 128)
    per_tap = bool(per_tap) and stride == 1 and K > 1

    # ---- tiling: lane-dense time tiles (mult. of 128), Cout padded to 8 ----
    Tt = min(_round_up(t_tile, 128), _round_up(Tout, 128))
    nT = (Tout + Tt - 1) // Tt
    Cout_pad = _round_up(Cout, 8)
    Tblk = Tt * stride
    bpt = Tblk // 128                     # 128-col blocks per input tile
    KCin = K * Cin

    # ---- parameter prep (tiny, host-side XLA glue) ----
    # Fold taps into the contraction: W2[co, k*Cin + ci] = W[co, ci, k].
    w2 = jnp.transpose(weight, (0, 2, 1)).reshape(Cout, KCin)
    w2 = jnp.pad(w2, ((0, Cout_pad - Cout), (0, 0))).astype(compute_dtype)
    bias_p = jnp.pad(bias.astype(jnp.float32), (0, Cout_pad - Cout))
    gamma_p = jnp.pad(gamma.astype(jnp.float32), (0, Cout_pad - Cout))
    beta_p = jnp.pad(beta.astype(jnp.float32), (0, Cout_pad - Cout))
    bias_col = bias_p.reshape(Cout_pad, 1)

    # PReLU alpha: scalar or per-channel.
    alpha_vec = jnp.asarray(prelu_alpha, jnp.float32).reshape(-1)
    if alpha_vec.shape[0] == 1:
        alpha_vec = jnp.broadcast_to(alpha_vec, (Cout,))
    assert alpha_vec.shape[0] == Cout, "PReLU alpha must be scalar or per-channel"
    alpha_col = jnp.pad(alpha_vec, (0, Cout_pad - Cout)).reshape(Cout_pad, 1)

    # Zero-pad the time axis: conv padding + one extra 128-col halo block.
    # TODO(synk): fold the conv padding into the kernel to drop this HBM copy.
    Tp = nT * Tblk + 128
    rpad = Tp - pad - T
    assert rpad >= 0
    x_p = jnp.pad(x, ((0, 0), (0, 0), (pad, rpad))).astype(compute_dtype)

    # ---- explicit VMEM budgets (review: set vmem_limit_bytes per call) ----
    itc = jnp.dtype(compute_dtype).itemsize
    ito = jnp.dtype(x.dtype).itemsize
    in_bytes = (2 * Cin * Tblk * itc          # x block, double-buffered
                + 2 * Cin * 128 * itc         # 128-col halo block
                + 2 * Cout_pad * KCin * itc)  # weights (TODO: single-buffer)
    if per_tap:
        transient = Cin * Tt * itc + Cout_pad * Tt * 4
    else:
        transient = (KCin * Tt + Cin * (Tblk + 128)) * itc + Cout_pad * Tt * 4
    stats_bytes = in_bytes + transient + 2 * Cout_pad * 128 * 4 + 2 * 8 * 128 * 4
    apply_bytes = (in_bytes + transient + 6 * Cout_pad * 128 * 4
                   + 2 * Cout_pad * Tt * ito)

    def _vmem_limit(b):
        # >=32 MiB is safe on every generation; cap at 48 MiB so the working
        # set stays inside v7x's 64 MiB physical VMEM (shrink t_tile instead
        # of raising the cap).
        return int(min(max(b * 3 // 2 + (2 << 20), 32 << 20), 48 << 20))

    # ---- sweep 1: per-(batch, time-tile) partial statistics ----
    stats_kernel = functools.partial(_stats_kernel, k_size=K, stride=stride,
                                     t_tile=Tt, tout=Tout, per_tap=per_tap)
    part = pl.pallas_call(
        stats_kernel,
        out_shape=jax.ShapeDtypeStruct((B, nT * 8, 128), jnp.float32),
        grid_spec=pltpu.PrefetchScalarGridSpec(
            num_scalar_prefetch=0,
            grid=(B, nT),
            in_specs=[
                pl.BlockSpec((1, Cin, Tblk), lambda b, t: (b, 0, t)),
                pl.BlockSpec((1, Cin, 128), lambda b, t: (b, 0, (t + 1) * bpt)),
                pl.BlockSpec((Cout_pad, KCin), lambda b, t: (0, 0)),
                pl.BlockSpec((Cout_pad, 1), lambda b, t: (0, 0)),
            ],
            out_specs=pl.BlockSpec((1, 8, 128), lambda b, t: (b, t, 0)),
        ),
        compiler_params=pltpu.CompilerParams(
            dimension_semantics=("parallel", "parallel"),
            vmem_limit_bytes=_vmem_limit(stats_bytes)),
    )(x_p, x_p, w2, bias_col)

    # ---- glue: per-batch mean/rstd, folded with gamma/beta/bias ----
    part = part.reshape(B, nT, 8, 128)
    s = jnp.sum(part[:, :, 0, 0], axis=1)
    ss = jnp.sum(part[:, :, 0, 1], axis=1)
    n = float(Cout * Tout)
    mean = s / n
    # One-pass variance in f32; per-tile partials keep the accumulation
    # chunked (documented trade-off vs the reference's two-pass form).
    var = jnp.maximum(ss / n - mean * mean, 0.0)
    rstd = lax.rsqrt(var + 1e-8)
    scale = gamma_p[None, :] * rstd[:, None]                      # (B, Cout_pad)
    shift = scale * (bias_p[None, :] - mean[:, None]) + beta_p[None, :]
    scale = scale[:, :, None]                                     # (B, Cout_pad, 1)
    shift = shift[:, :, None]

    # ---- sweep 2: conv + folded GlobLN affine + PReLU ----
    apply_kernel = functools.partial(_apply_kernel, k_size=K, stride=stride,
                                     t_tile=Tt, per_tap=per_tap)
    y = pl.pallas_call(
        apply_kernel,
        out_shape=jax.ShapeDtypeStruct((B, Cout_pad, Tout), x.dtype),
        grid_spec=pltpu.PrefetchScalarGridSpec(
            num_scalar_prefetch=0,
            grid=(B, nT),
            in_specs=[
                pl.BlockSpec((1, Cin, Tblk), lambda b, t: (b, 0, t)),
                pl.BlockSpec((1, Cin, 128), lambda b, t: (b, 0, (t + 1) * bpt)),
                pl.BlockSpec((Cout_pad, KCin), lambda b, t: (0, 0)),
                pl.BlockSpec((1, Cout_pad, 1), lambda b, t: (b, 0, 0)),
                pl.BlockSpec((1, Cout_pad, 1), lambda b, t: (b, 0, 0)),
                pl.BlockSpec((Cout_pad, 1), lambda b, t: (0, 0)),
            ],
            out_specs=pl.BlockSpec((1, Cout_pad, Tt), lambda b, t: (b, 0, t)),
        ),
        compiler_params=pltpu.CompilerParams(
            dimension_semantics=("parallel", "parallel"),
            vmem_limit_bytes=_vmem_limit(apply_bytes)),
    )(x_p, x_p, w2, scale, shift, alpha_col)

    if Cout_pad != Cout:
        y = y[:, :Cout, :]          # channel crop only; time axis is exact
    return y


def _reference(x, weight, bias, gamma, beta, alpha, stride=1):
    """Pure-JAX reference mirroring the PyTorch module."""
    K = weight.shape[-1]
    pad = (K - 1) // 2
    y = lax.conv_general_dilated(
        x, weight, window_strides=(stride,), padding=[(pad, pad)],
        dimension_numbers=("NCH", "OIH", "NCH"))
    y = y + bias[None, :, None]
    mean = jnp.mean(y, axis=(1, 2), keepdims=True)
    var = jnp.mean((y - mean) ** 2, axis=(1, 2), keepdims=True)
    y = gamma[None, :, None] * ((y - mean) / jnp.sqrt(var + 1e-8)) + beta[None, :, None]
    return jnp.where(y > 0, y, alpha * y)


if __name__ == "__main__":
    key = jax.random.PRNGKey(0)
    alpha = jnp.float32(0.25)                 # PReLU default init

    def _make(key, b, cin, cout, t, k):
        ks = jax.random.split(key, 5)
        x = jax.random.normal(ks[0], (b, cin, t), jnp.float32)
        w = jax.random.normal(ks[1], (cout, cin, k), jnp.float32) / (cin * k) ** 0.5
        bb = jax.random.normal(ks[2], (cout,), jnp.float32) * 0.1
        g = 1.0 + 0.1 * jax.random.normal(ks[3], (cout,), jnp.float32)
        be = 0.1 * jax.random.normal(ks[4], (cout,), jnp.float32)
        return x, w, bb, g, be

    def _check(out, ref, tol):
        assert out.shape == ref.shape, (out.shape, ref.shape)
        err = float(jnp.max(jnp.abs(out - ref)))
        assert jnp.allclose(out, ref, atol=tol, rtol=tol), err

    # --- config 1: nominal small shape (f32 + bf16 compute paths) ---
    k1, k2, k3 = jax.random.split(key, 3)
    x, w, b, g, be = _make(k1, 2, 4, 8, 16, 3)
    out = jax.block_until_ready(conv_norm_act(x, w, b, g, be, alpha, stride=1))
    ref = _reference(x, w, b, g, be, alpha, stride=1)
    _check(out, ref, 2e-4)
    out_bf16 = jax.block_until_ready(
        conv_norm_act(x, w, b, g, be, alpha, stride=1,
                      compute_dtype=jnp.bfloat16))
    _check(out_bf16, ref, 5e-2)

    # --- config 2: non-aligned Cout and K=5 (channel padding + column mask) ---
    x2, w2_, b2_, g2_, be2_ = _make(k2, 1, 3, 5, 20, 5)
    out2 = jax.block_until_ready(
        conv_norm_act(x2, w2_, b2_, g2_, be2_, alpha, stride=1))
    ref2 = _reference(x2, w2_, b2_, g2_, be2_, alpha, stride=1)
    _check(out2, ref2, 2e-4)

    # --- config 3: multi time-tile (exercises the 128-col halo) in both the
    #     folded and the per-tap conv paths ---
    x3, w3, b3, g3, be3 = _make(k3, 1, 8, 8, 200, 3)
    ref3 = _reference(x3, w3, b3, g3, be3, alpha, stride=1)
    out3a = jax.block_until_ready(
        conv_norm_act(x3, w3, b3, g3, be3, alpha, stride=1, t_tile=128))
    _check(out3a, ref3, 2e-4)
    out3b = jax.block_until_ready(
        conv_norm_act(x3, w3, b3, g3, be3, alpha, stride=1, t_tile=128,
                      per_tap=True))
    _check(out3b, ref3, 2e-4)

    print("KERNEL_OK")
</pallas_src>

<mosaic_0001>
module attributes {stable_mosaic.version = 11 : i64} {
  func.func @_stats_kernel(%arg0: i32, %arg1: i32, %arg2: memref<1x4x128xf32, #tpu.memory_space<vmem>>, %arg3: memref<1x4x128xf32, #tpu.memory_space<vmem>>, %arg4: memref<8x12xf32, #tpu.memory_space<vmem>>, %arg5: memref<8x1xf32, #tpu.memory_space<vmem>>, %arg6: memref<1x8x128xf32, #tpu.memory_space<vmem>>) attributes {dimension_semantics = [#tpu.dimension_semantics<parallel>, #tpu.dimension_semantics<parallel>], iteration_bounds = array<i64: 2, 1>, scalar_prefetch = 0 : i64, scratch_operands = 0 : i64, tpu.core_type = #tpu.core_type<tc>, window_params = [{transform_indices = @transform_0, window_bounds = array<i64: 1, 4, 128>}, {transform_indices = @transform_1, window_bounds = array<i64: 1, 4, 128>}, {pipeline_mode = #tpu.pipeline_mode<synchronous>, transform_indices = @transform_2, window_bounds = array<i64: 8, 12>}, {pipeline_mode = #tpu.pipeline_mode<synchronous>, transform_indices = @transform_3, window_bounds = array<i64: 8, 1>}, {transform_indices = @transform_4, window_bounds = array<i64: 1, 8, 128>}]} {
    %c0 = arith.constant 0 : index
    %c0_0 = arith.constant 0 : index
    %c0_1 = arith.constant 0 : index
    %0 = vector.load %arg2[%c0, %c0_0, %c0_1] : memref<1x4x128xf32, #tpu.memory_space<vmem>>, vector<1x4x128xf32>
    %1 = vector.shape_cast %0 : vector<1x4x128xf32> to vector<4x128xf32>
    %c0_2 = arith.constant 0 : index
    %c0_3 = arith.constant 0 : index
    %c0_4 = arith.constant 0 : index
    %2 = vector.load %arg3[%c0_2, %c0_3, %c0_4] : memref<1x4x128xf32, #tpu.memory_space<vmem>>, vector<1x4x2xf32>
    %3 = vector.shape_cast %2 : vector<1x4x2xf32> to vector<4x2xf32>
    %4 = tpu.concatenate %1, %3 in 1 : vector<4x128xf32>, vector<4x2xf32> -> vector<4x130xf32>
    %5 = vector.extract_strided_slice %4 {offsets = [0, 0], sizes = [4, 128], strides = [1, 1]} : vector<4x130xf32> to vector<4x128xf32>
    %6 = vector.extract_strided_slice %4 {offsets = [0, 1], sizes = [4, 128], strides = [1, 1]} : vector<4x130xf32> to vector<4x128xf32>
    %7 = vector.extract_strided_slice %4 {offsets = [0, 2], sizes = [4, 128], strides = [1, 1]} : vector<4x130xf32> to vector<4x128xf32>
    %8 = tpu.concatenate %5, %6, %7 in 0 : vector<4x128xf32>, vector<4x128xf32>, vector<4x128xf32> -> vector<12x128xf32>
    %c0_5 = arith.constant 0 : index
    %c0_6 = arith.constant 0 : index
    %9 = vector.load %arg4[%c0_5, %c0_6] : memref<8x12xf32, #tpu.memory_space<vmem>>, vector<8x12xf32>
    %cst = arith.constant dense<0.000000e+00> : vector<8x128xf32>
    %10 = tpu.matmul %9, %8, %cst {dimension_numbers = #tpu.dot_dimension_numbers<[1], [0], [0], [1], [0, 0, 1, 1], [], []>} : vector<8x12xf32>, vector<12x128xf32>, vector<8x128xf32> -> vector<8x128xf32>
    %c0_7 = arith.constant 0 : index
    %c0_8 = arith.constant 0 : index
    %11 = vector.load %arg5[%c0_7, %c0_8] : memref<8x1xf32, #tpu.memory_space<vmem>>, vector<8x1xf32>
    %12 = vector.broadcast %11 : vector<8x1xf32> to vector<8x128xf32>
    %13 = arith.addf %10, %12 : vector<8x128xf32>
    %14 = tpu.iota {dimensions = array<i32: 1>} : vector<8x128xi32>
    %c128_i32 = arith.constant 128 : i32
    %15 = arith.muli %arg1, %c128_i32 : i32
    %16 = vector.broadcast %15 : i32 to vector<8x128xi32>
    %17 = arith.addi %14, %16 : vector<8x128xi32>
    %c16_i32 = arith.constant 16 : i32
    %18 = vector.broadcast %c16_i32 : i32 to vector<8x128xi32>
    %19 = arith.cmpi slt, %17, %18 : vector<8x128xi32>
    %cst_9 = arith.constant 0.000000e+00 : f32
    %20 = vector.broadcast %cst_9 : f32 to vector<8x128xf32>
    %21 = arith.select %19, %13, %20 : vector<8x128xi1>, vector<8x128xf32>
    %22 = vector.shape_cast %21 : vector<8x128xf32> to vector<1x8x128xf32>
    %cst_10 = arith.constant dense<0.000000e+00> : vector<1xf32>
    %23 = vector.multi_reduction <add>, %22, %cst_10 [1, 2] : vector<1x8x128xf32> to vector<1xf32>
    %24 = vector.shape_cast %23 : vector<1xf32> to vector<1x1x1xf32>
    %25 = vector.extract %24[0, 0, 0] : f32 from vector<1x1x1xf32>
    %26 = arith.mulf %21, %21 : vector<8x128xf32>
    %27 = vector.shape_cast %26 : vector<8x128xf32> to vector<1x8x128xf32>
    %cst_11 = arith.constant dense<0.000000e+00> : vector<1xf32>
    %28 = vector.multi_reduction <add>, %27, %cst_11 [1, 2] : vector<1x8x128xf32> to vector<1xf32>
    %29 = vector.shape_cast %28 : vector<1xf32> to vector<1x1x1xf32>
    %30 = vector.extract %29[0, 0, 0] : f32 from vector<1x1x1xf32>
    %31 = tpu.iota {dimensions = array<i32: 0>} : vector<8x128xi32>
    %32 = tpu.iota {dimensions = array<i32: 1>} : vector<8x128xi32>
    %c0_i32 = arith.constant 0 : i32
    %33 = vector.broadcast %c0_i32 : i32 to vector<8x128xi32>
    %34 = arith.cmpi eq, %31, %33 : vector<8x128xi32>
    %c0_i32_12 = arith.constant 0 : i32
    %35 = vector.broadcast %c0_i32_12 : i32 to vector<8x128xi32>
    %36 = arith.cmpi eq, %32, %35 : vector<8x128xi32>
    %37 = arith.andi %34, %36 : vector<8x128xi1>
    %c0_i32_13 = arith.constant 0 : i32
    %38 = vector.broadcast %c0_i32_13 : i32 to vector<8x128xi32>
    %39 = arith.cmpi eq, %31, %38 : vector<8x128xi32>
    %c1_i32 = arith.constant 1 : i32
    %40 = vector.broadcast %c1_i32 : i32 to vector<8x128xi32>
    %41 = arith.cmpi eq, %32, %40 : vector<8x128xi32>
    %42 = arith.andi %39, %41 : vector<8x128xi1>
    %cst_14 = arith.constant 0.000000e+00 : f32
    %43 = vector.broadcast %30 : f32 to vector<8x128xf32>
    %44 = vector.broadcast %cst_14 : f32 to vector<8x128xf32>
    %45 = arith.select %42, %43, %44 : vector<8x128xi1>, vector<8x128xf32>
    %46 = vector.broadcast %25 : f32 to vector<8x128xf32>
    %47 = arith.select %37, %46, %45 : vector<8x128xi1>, vector<8x128xf32>
    %c0_15 = arith.constant 0 : index
    %c0_16 = arith.constant 0 : index
    %c0_17 = arith.constant 0 : index
    %48 = vector.load %arg6[%c0_15, %c0_16, %c0_17] : memref<1x8x128xf32, #tpu.memory_space<vmem>>, vector<1x8x128xf32>
    %49 = vector.shape_cast %48 : vector<1x8x128xf32> to vector<8x128xf32>
    %50 = vector.shape_cast %47 : vector<8x128xf32> to vector<1x8x128xf32>
    tpu.vector_store %arg6[%c0_15, %c0_16, %c0_17], %50 {strides = array<i32>} : memref<1x8x128xf32, #tpu.memory_space<vmem>>, vector<1x8x128xf32>,
    return
  }
  func.func @transform_0(%arg0: i32, %arg1: i32) -> (i32, i32, i32) {
    %c0_i32 = arith.constant 0 : i32
    %c0_i32_0 = arith.constant 0 : i32
    return %arg0, %c0_i32, %arg1 : i32, i32, i32
  }
  func.func @transform_1(%arg0: i32, %arg1: i32) -> (i32, i32, i32) {
    %c1_i32 = arith.constant 1 : i32
    %0 = arith.addi %arg1, %c1_i32 : i32
    %c1_i32_0 = arith.constant 1 : i32
    %1 = arith.muli %0, %c1_i32_0 : i32
    %c0_i32 = arith.constant 0 : i32
    %c0_i32_1 = arith.constant 0 : i32
    return %arg0, %c0_i32, %1 : i32, i32, i32
  }
  func.func @transform_2(%arg0: i32, %arg1: i32) -> (i32, i32) {
    %c0_i32 = arith.constant 0 : i32
    %c0_i32_0 = arith.constant 0 : i32
    %c0_i32_1 = arith.constant 0 : i32
    return %c0_i32, %c0_i32_0 : i32, i32
  }
  func.func @transform_3(%arg0: i32, %arg1: i32) -> (i32, i32) {
    %c0_i32 = arith.constant 0 : i32
    %c0_i32_0 = arith.constant 0 : i32
    %c0_i32_1 = arith.constant 0 : i32
    return %c0_i32, %c0_i32_0 : i32, i32
  }
  func.func @transform_4(%arg0: i32, %arg1: i32) -> (i32, i32, i32) {
    %c0_i32 = arith.constant 0 : i32
    %c0_i32_0 = arith.constant 0 : i32
    return %arg0, %arg1, %c0_i32 : i32, i32, i32
  }
}

</mosaic_0001>

<llo_original>
// kernel: tpu_custom_call.1
$region0: #{tpu_custom_call.1}
  #allocation0 [shape = 'u32[]', space=smem, size = 0x4, offset = 0x4, fixed_abs, tag = 'smem constant byte address 0x4 - core index']
  #allocation1 [shape = 'u32[144,128]{1,0:T(1,128)}', space=vmem, size = 0x12000, scoped, tag = 'internal scratch']
  %s0 = inlined_call_operand.hbm [shape: f32[2,4,256], index: 0, kind: input, shape index: {}]
  %s1 = inlined_call_operand.hbm [shape: f32[2,4,256], index: 1, kind: input, shape index: {}]
  %s2 = inlined_call_operand.vmem [shape: f32[8,12], index: 2, kind: input, shape index: {}]
  %s3 = inlined_call_operand.vmem [shape: f32[8,1], index: 3, kind: input, shape index: {}]
  %s4 = inlined_call_operand.hbm [shape: f32[2,8,128], index: 4, kind: output, shape index: {}]
  %s5 = sld [smem:[#allocation0]]
  $region57: #{tpu_custom_call.1} parent=0
    _
  %s7 = ssub.s32 1, %s5
  %s8 = scalar_select 0, %s7, %s5
  $region1: #{tpu_custom_call.1} parent=0
    #allocation2 [shape = 'u8[4096]{0}', space=vmem, size = 0x1000, scoped, tag = 'input window, operand 0']
    #allocation3 [shape = 's32[2]{0}', space=sflag, size = 0x8, scoped, tag = 'scoped memory for tpu_custom_call.1']
    #allocation4 [shape = 's32[2]{0}', space=sflag, size = 0x8, scoped, tag = 'scoped memory for tpu_custom_call.1']
    #allocation5 [shape = 'u8[4096]{0}', space=vmem, size = 0x1000, scoped, tag = 'input window, operand 1']
    #allocation6 [shape = 's32[2]{0}', space=sflag, size = 0x8, scoped, tag = 'scoped memory for tpu_custom_call.1']
    #allocation7 [shape = 'u8[8192]{0}', space=vmem, size = 0x2000, scoped, tag = 'output window, operand 0']
    %9 = vsyncpa [#allocation3], 0
    %s10 = scalar_lea.sflag [#allocation3], 1
    %11 = vsyncpa %s10, 0
    %12 = vsyncpa [#allocation6], 0
    %s13 = scalar_lea.sflag [#allocation6], 1
    %14 = vsyncpa %s13, 0
    %15 = vsyncpa [#allocation4], 0
    %s16 = scalar_lea.sflag [#allocation4], 1
    %17 = vsyncpa %s16, 0
    loop: start=0, step=1, limit=4
    $region2: #{tpu_custom_call.1} parent=1 // loop_pre_header
      _
    $region3: #{tpu_custom_call.1} parent=1 // loop_header
      %s19 = sphi 0, %s23
      %p20 = scmp.ge.s32.totalorder %s19, 4
      %s26 = sphi 0, %s38
      %s27 = sphi 0, %s34
      %s28 = sphi 0, %s26
      %s29 = sphi 0, %s27
      %s30 = sphi 0, %s28
      %s31 = sphi 0, %s29
      %s43 = sphi 0, %s45
      %s46 = sphi 0, %s43
      %s47 = sphi 0, %s46
      %s63 = sphi 0, %s47
      %s73 = sphi 0, %s75
      %s76 = sphi 0, %s73
      %s77 = sphi 0, %s76
      %s93 = sphi 0, %s77
      %s97 = sphi 0, %s97
      %s99 = sphi 0, %s97
      %s100 = sphi 0, %s99
      %s114 = sphi 0, %s100
      %s118 = sphi 0, %s118
      %s120 = sphi 0, %s118
      %s121 = sphi 0, %s120
      %s135 = sphi 0, %s121
      %s143 = sphi 0, %s145
      %s146 = sphi 0, %s143
      %s147 = sphi 0, %s146
      %s163 = sphi 0, %s147
    $region4: #{tpu_custom_call.1} parent=1 // loop_header_branch
      %22 = sbr.rel (%p20) target = $region8
    $region5: #{tpu_custom_call.1} parent=1 // loop_body
      %s24 = ssub.s32 %s19, 1
      %s25 = ssub.s32 %s19, 2
      %s32 = sadd.s32 1, %s27
      %p33 = scmp.ge.s32.totalorder %s32, 1
      %s34 = scalar_select %p33, 0, %s32
      %s35 = sadd.s32 1, %s26
      %s36 = scalar_select %p33, %s35, %s26
      %p37 = scmp.ge.s32.totalorder %s36, 2
      %s38 = scalar_select %p37, 0, %s36
      %s39 = ssub.s32 %s26, %s38
      %s40 = ssub.s32 %s27, %s34
      %s41 = sor.u32 %s39, %s40
      %p42 = scmp.eq.s32.totalorder %s41, 0
      %s44 = sadd.s32 %s43, 1
      %s45 = scalar_select %p42, %s43, %s44
      %p48 = pneg %p42
      %p49 = scmp.eq.s32.totalorder %s19, 1
      %p50 = por %p48, %p49
      %p51 = scmp.ne.s32.totalorder %s43, %s46
      %p52 = scmp.eq.s32.totalorder %s19, 0
      %p53 = por %p51, %p52
      %p54 = scmp.ne.s32.totalorder %s43, %s46
      %p55 = scmp.eq.s32.totalorder %s24, 1
      %p56 = por %p54, %p55
      %p57 = scmp.ne.s32.totalorder %s46, %s47
      %p58 = scmp.eq.s32.totalorder %s24, 0
      %p59 = por %p57, %p58
      %p60 = scmp.ne.s32.totalorder %s46, %s47
      %p61 = scmp.eq.s32.totalorder %s25, 1
      %p62 = por %p60, %p61
      %p64 = scmp.ne.s32.totalorder %s47, %s63
      %p65 = scmp.eq.s32.totalorder %s25, 0
      %p66 = por %p64, %p65
      %s67 = sadd.s32 %s27, 1
      %s68 = sadd.s32 %s34, 1
      %s69 = ssub.s32 %s26, %s38
      %s70 = ssub.s32 %s67, %s68
      %s71 = sor.u32 %s69, %s70
      %p72 = scmp.eq.s32.totalorder %s71, 0
      %s74 = sadd.s32 %s73, 1
      %s75 = scalar_select %p72, %s73, %s74
      %p78 = pneg %p72
      %p79 = scmp.eq.s32.totalorder %s19, 1
      %p80 = por %p78, %p79
      %p81 = scmp.ne.s32.totalorder %s73, %s76
      %p82 = scmp.eq.s32.totalorder %s19, 0
      %p83 = por %p81, %p82
      %p84 = scmp.ne.s32.totalorder %s73, %s76
      %p85 = scmp.eq.s32.totalorder %s24, 1
      %p86 = por %p84, %p85
      %p87 = scmp.ne.s32.totalorder %s76, %s77
      %p88 = scmp.eq.s32.totalorder %s24, 0
      %p89 = por %p87, %p88
      %p90 = scmp.ne.s32.totalorder %s76, %s77
      %p91 = scmp.eq.s32.totalorder %s25, 1
      %p92 = por %p90, %p91
      %p94 = scmp.ne.s32.totalorder %s77, %s93
      %p95 = scmp.eq.s32.totalorder %s25, 0
      %p96 = por %p94, %p95
      %s98 = sadd.s32 %s97, 1
      %p101 = scmp.eq.s32.totalorder %s19, 1
      %p102 = scmp.ne.s32.totalorder %s97, %s99
      %p103 = scmp.eq.s32.totalorder %s19, 0
      %p104 = por %p102, %p103
      %p105 = scmp.ne.s32.totalorder %s97, %s99
      %p106 = scmp.eq.s32.totalorder %s24, 1
      %p107 = por %p105, %p106
      %p108 = scmp.ne.s32.totalorder %s99, %s100
      %p109 = scmp.eq.s32.totalorder %s24, 0
      %p110 = por %p108, %p109
      %p111 = scmp.ne.s32.totalorder %s99, %s100
      %p112 = scmp.eq.s32.totalorder %s25, 1
      %p113 = por %p111, %p112
      %p115 = scmp.ne.s32.totalorder %s100, %s114
      %p116 = scmp.eq.s32.totalorder %s25, 0
      %p117 = por %p115, %p116
      %s119 = sadd.s32 %s118, 1
      %p122 = scmp.eq.s32.totalorder %s19, 1
      %p123 = scmp.ne.s32.totalorder %s118, %s120
      %p124 = scmp.eq.s32.totalorder %s19, 0
      %p125 = por %p123, %p124
      %p126 = scmp.ne.s32.totalorder %s118, %s120
      %p127 = scmp.eq.s32.totalorder %s24, 1
      %p128 = por %p126, %p127
      %p129 = scmp.ne.s32.totalorder %s120, %s121
      %p130 = scmp.eq.s32.totalorder %s24, 0
      %p131 = por %p129, %p130
      %p132 = scmp.ne.s32.totalorder %s120, %s121
      %p133 = scmp.eq.s32.totalorder %s25, 1
      %p134 = por %p132, %p133
      %p136 = scmp.ne.s32.totalorder %s121, %s135
      %p137 = scmp.eq.s32.totalorder %s25, 0
      %p138 = por %p136, %p137
      %s139 = ssub.s32 %s26, %s38
      %s140 = ssub.s32 %s27, %s34
      %s141 = sor.u32 %s139, %s140
      %p142 = scmp.eq.s32.totalorder %s141, 0
      %s144 = sadd.s32 %s143, 1
      %s145 = scalar_select %p142, %s143, %s144
      %p148 = pneg %p142
      %p149 = scmp.eq.s32.totalorder %s19, 1
      %p150 = por %p148, %p149
      %p151 = scmp.ne.s32.totalorder %s143, %s146
      %p152 = scmp.eq.s32.totalorder %s19, 0
      %p153 = por %p151, %p152
      %p154 = scmp.ne.s32.totalorder %s143, %s146
      %p155 = scmp.eq.s32.totalorder %s24, 1
      %p156 = por %p154, %p155
      %p157 = scmp.ne.s32.totalorder %s146, %s147
      %p158 = scmp.eq.s32.totalorder %s24, 0
      %p159 = por %p157, %p158
      %p160 = scmp.ne.s32.totalorder %s146, %s147
      %p161 = scmp.eq.s32.totalorder %s25, 1
      %p162 = por %p160, %p161
      %p164 = scmp.ne.s32.totalorder %s147, %s163
      %p165 = scmp.eq.s32.totalorder %s25, 0
      %p166 = por %p164, %p165
      %p167 = scmp.le.s32.totalorder 1, %s19
      %p168 = scmp.lt.s32.totalorder %s19, 3
      %p169 = pnand %p167, %p168
      %p170 = pneg %p169
      // Predicated region
      $region9: #{tpu_custom_call.1} parent=5 // pred_check
        _
      $region10: #{tpu_custom_call.1} parent=5 // pred_check_branch
        %172 = sbr.rel (%p169) target = $region12
      $region11: #{tpu_custom_call.1} parent=5 // pred_region
        %s173 = ssub.s32 %s19, 1
        // Predicated region
        $region13: #{tpu_custom_call.1} parent=11 // pred_check
          %p174 = pneg %p110
        $region14: #{tpu_custom_call.1} parent=11 // pred_check_branch
          %176 = sbr.rel (%p174) target = $region16
        $region15: #{tpu_custom_call.1} parent=11 // pred_region
          _
        $region16: #{tpu_custom_call.1} parent=11 // pred_fallthru
          _
        // Predicated region
        $region17: #{tpu_custom_call.1} parent=11 // pred_check
          %p177 = pneg %p131
        $region18: #{tpu_custom_call.1} parent=11 // pred_check_branch
          %179 = sbr.rel (%p177) target = $region20
        $region19: #{tpu_custom_call.1} parent=11 // pred_region
          _
        $region20: #{tpu_custom_call.1} parent=11 // pred_fallthru
          _
      $region12: #{tpu_custom_call.1} parent=5 // pred_fallthru
        _
      %p180 = scmp.lt.s32.totalorder %s19, 2
      // Predicated region
      $region21: #{tpu_custom_call.1} parent=5 // pred_check
        %p181 = pneg %p180
      $region22: #{tpu_custom_call.1} parent=5 // pred_check_branch
        %183 = sbr.rel (%p181) target = $region24
      $region23: #{tpu_custom_call.1} parent=5 // pred_region
        // Predicated region
        $region25: #{tpu_custom_call.1} parent=23 // pred_check
          %p184 = pneg %p53
        $region26: #{tpu_custom_call.1} parent=23 // pred_check_branch
          %186 = sbr.rel (%p184) target = $region28
        $region27: #{tpu_custom_call.1} parent=23 // pred_region
          %s187 = sand.u32 %s43, 1
          %s188 = scalar_lea.sflag [#allocation3], %s187
          %s189 = sand.u32 %s43, 1
          %s190 = smul.addr %s189, 4
          %s191 = scalar_lea.vmem [#allocation2], %s190
          %s193 = ssub.s32 64, 64
          %194 = vsyncadd %s188, %s193
          %s195 = smul.addr %s26, 2
          %s196 = sadd.s32 %s27, %s195
          %s197 = smul.addr %s196, 64
          %s198 = scalar_lea.hbm %s0, %s197
          %s200 = sshll.u32 %s191, 4
          %s201 = int_to_ptr.vmem [resolvable:$true] %s200
          %203 = dma.hbm_to_vmem [thread:$0]  %s198, 64, %s201, %s188
        $region28: #{tpu_custom_call.1} parent=23 // pred_fallthru
          _
        // Predicated region
        $region29: #{tpu_custom_call.1} parent=23 // pred_check
          %p204 = pneg %p83
        $region30: #{tpu_custom_call.1} parent=23 // pred_check_branch
          %206 = sbr.rel (%p204) target = $region32
        $region31: #{tpu_custom_call.1} parent=23 // pred_region
          %s207 = sand.u32 %s73, 1
          %s208 = scalar_lea.sflag [#allocation6], %s207
          %s209 = sand.u32 %s73, 1
          %s210 = smul.addr %s209, 4
          %s211 = scalar_lea.vmem [#allocation5], %s210
          %s212 = sadd.s32 %s27, 1
          %s214 = ssub.s32 64, 64
          %215 = vsyncadd %s208, %s214
          %s216 = smul.addr %s26, 2
          %s217 = sadd.s32 %s212, %s216
          %s218 = smul.addr %s217, 64
          %s219 = scalar_lea.hbm %s1, %s218
          %s221 = sshll.u32 %s211, 4
          %s222 = int_to_ptr.vmem [resolvable:$true] %s221
          %224 = dma.hbm_to_vmem [thread:$0]  %s219, 64, %s222, %s208
        $region32: #{tpu_custom_call.1} parent=23 // pred_fallthru
          _
      $region24: #{tpu_custom_call.1} parent=5 // pred_fallthru
        _
      %p225 = scmp.le.s32.totalorder 1, %s19
      %p226 = scmp.lt.s32.totalorder %s19, 3
      %p227 = pnand %p225, %p226
      %p228 = pneg %p227
      // Predicated region
      $region33: #{tpu_custom_call.1} parent=5 // pred_check
        _
      $region34: #{tpu_custom_call.1} parent=5 // pred_check_branch
        %230 = sbr.rel (%p227) target = $region36
      $region35: #{tpu_custom_call.1} parent=5 // pred_region
        %s231 = ssub.s32 %s19, 1
        %s232 = sand.u32 %s46, 1
        %s233 = scalar_lea.sflag [#allocation3], %s232
        %s234 = sand.u32 %s46, 1
        %s235 = smul.addr %s234, 4
        %s236 = scalar_lea.vmem [#allocation2], %s235
        // Predicated region
        $region37: #{tpu_custom_call.1} parent=35 // pred_check
          %p237 = pneg %p59
        $region38: #{tpu_custom_call.1} parent=35 // pred_check_branch
          %239 = sbr.rel (%p237) target = $region40
        $region39: #{tpu_custom_call.1} parent=35 // pred_region
          %240 = dma.done %s233, 64
        $region40: #{tpu_custom_call.1} parent=35 // pred_fallthru
          _
        %s241 = sand.u32 %s76, 1
        %s242 = scalar_lea.sflag [#allocation6], %s241
        %s243 = sand.u32 %s76, 1
        %s244 = smul.addr %s243, 4
        %s245 = scalar_lea.vmem [#allocation5], %s244
        // Predicated region
        $region41: #{tpu_custom_call.1} parent=35 // pred_check
          %p246 = pneg %p89
        $region42: #{tpu_custom_call.1} parent=35 // pred_check_branch
          %248 = sbr.rel (%p246) target = $region44
        $region43: #{tpu_custom_call.1} parent=35 // pred_region
          %249 = dma.done %s242, 64
        $region44: #{tpu_custom_call.1} parent=35 // pred_fallthru
          _
        %s250 = sand.u32 %s46, 1
        %s251 = scalar_lea.sflag [#allocation3], %s250
        %s252 = sand.u32 %s46, 1
        %s253 = smul.addr %s252, 4
        %s254 = scalar_lea.vmem [#allocation2], %s253
        %p255 = pneg %p59
        %p256 = pneg %p56
        %s257 = sand.u32 %s76, 1
        %s258 = scalar_lea.sflag [#allocation6], %s257
        %s259 = sand.u32 %s76, 1
        %s260 = smul.addr %s259, 4
        %s261 = scalar_lea.vmem [#allocation5], %s260
        %p262 = pneg %p89
        %p263 = pneg %p86
        %p264 = pneg %p110
        %p265 = pneg %p107
        %p266 = pneg %p131
        %p267 = pneg %p128
        %p268 = pneg %p159
        %p269 = pneg %p156
        %s270 = sand.u32 %s146, 1
        %s271 = scalar_lea.sflag [#allocation4], %s270
        %s272 = sand.u32 %s146, 1
        %s273 = smul.addr %s272, 8
        %s274 = scalar_lea.vmem [#allocation7], %s273
        %s275 = sadd.s32 %s29, 1
        %v276 = vld [vmem:[%s236] sm:$0xf]
        %v277 = vld [vmem:[%s245] sm:$0xf]
        %v280 = vrot.slane %v276, 4
        %v281 = vrot.slane %v277, 4
        %282 = vrot.lane.b32.xlu0 %v280, 127
        %v283 = vpop.permute.xlu0 %282
        %284 = vrot.lane.b32.xlu0 %v281, 127
        %v285 = vpop.permute.xlu0 %284
        %vm286 = vcmask 1039360
        %v287 = vsel %vm286, %v283, %v285
        %289 = vrot.lane.b32.xlu0 %v276, 126
        %v290 = vpop.permute.xlu0 %289
        %291 = vrot.lane.b32.xlu0 %v277, 126
        %v292 = vpop.permute.xlu0 %291
        %vm293 = vcmask 1031168
        %v294 = vsel %vm293, %v290, %v292
        %vm295 = vcmask 1043456
        %v296 = vsel %vm295, %v276, %v287
        %v297 = vld [vmem:[%s2] sm:$0xff]
        %v298 = vld [vmem:[%s3] sm:$0xff]
        %300 = vset.pattern.permute.xlu0 0
        %301 = vperm.xlu0 %300, %v298
        %v302 = vpop.permute.xlu0 %301
        %vm304 = vcmask 97280
        %v306 = vsel %vm304, %v297, 0
        %v308 = vsel %vm295, %v294, 0
        %310 = vmatprep.subr.mxu0 0.0
        %311 = vmatpush1.msra.mxu0 0.0
        %312 = vmatprep.subr.mxu0 0.0
        %313 = vmatpush1.msra.mxu0 0.0
        %314 = vmatprep.subr.mxu0 0.0
        %315 = vmatpush1.msra.mxu0 0.0
        %316 = vmatprep.subr.mxu0 0.0
        %317 = vmatpush1.msra.mxu0 0.0
        %318 = vmatprep.subr.mxu0 0.0
        %319 = vmatpush1.msra.mxu0 0.0
        %320 = vmatprep.subr.mxu0 0.0
        %321 = vmatpush1.msra.mxu0 0.0
        %322 = vmatprep.subr.mxu0 0.0
        %323 = vmatpush1.msra.mxu0 0.0
        %324 = vmatprep.subr.mxu0 0.0
        %325 = vmatpush1.msra.mxu0 0.0
        %326 = vmatprep.subr.mxu0 0.0
        %327 = vmatpush1.msra.mxu0 0.0
        %328 = vmatprep.subr.mxu0 0.0
        %329 = vmatpush1.msra.mxu0 0.0
        %330 = vmatprep.subr.mxu0 0.0
        %331 = vmatpush1.msra.mxu0 0.0
        %332 = vmatprep.subr.mxu0 0.0
        %333 = vmatpush1.msra.mxu0 0.0
        %334 = vmatprep.subr.mxu0 0.0
        %335 = vmatpush1.msra.mxu0 0.0
        %336 = vmatprep.subr.mxu0 0.0
        %337 = vmatpush1.msra.mxu0 0.0
        %338 = vmatprep.subr.mxu0 0.0
        %339 = vmatpush1.msra.mxu0 %v308
        %340 = vmatprep.subr.mxu0 0.0
        %341 = vmatpush1.msra.mxu0 %v296
        %342 = vmatprep.subr.mxu0 0.0
        %343 = vmatpush2.msra.mxu0 0.0
        %344 = vmatprep.subr.mxu0 0.0
        %345 = vmatpush2.msra.mxu0 0.0
        %346 = vmatprep.subr.mxu0 0.0
        %347 = vmatpush2.msra.mxu0 0.0
        %348 = vmatprep.subr.mxu0 0.0
        %349 = vmatpush2.msra.mxu0 0.0
        %350 = vmatprep.subr.mxu0 0.0
        %351 = vmatpush2.msra.mxu0 0.0
        %352 = vmatprep.subr.mxu0 0.0
        %353 = vmatpush2.msra.mxu0 0.0
        %354 = vmatprep.subr.mxu0 0.0
        %355 = vmatpush2.msra.mxu0 0.0
        %356 = vmatprep.subr.mxu0 0.0
        %357 = vmatpush2.msra.mxu0 0.0
        %358 = vmatprep.subr.mxu0 0.0
        %359 = vmatpush2.msra.mxu0 0.0
        %360 = vmatprep.subr.mxu0 0.0
        %361 = vmatpush2.msra.mxu0 0.0
        %362 = vmatprep.subr.mxu0 0.0
        %363 = vmatpush2.msra.mxu0 0.0
        %364 = vmatprep.subr.mxu0 0.0
        %365 = vmatpush2.msra.mxu0 0.0
        %366 = vmatprep.subr.mxu0 0.0
        %367 = vmatpush2.msra.mxu0 0.0
        %368 = vmatprep.subr.mxu0 0.0
        %369 = vmatpush2.msra.mxu0 0.0
        %370 = vmatprep.subr.mxu0 0.0
        %371 = vmatpush2.msra.mxu0 0.0
        %372 = vmatprep.subr.mxu0 0.0
        %373 = vmatpush2.msra.mxu0 0.0
        %374 = vmatprep.mubr.f32.mxu0 0.0
        %375 = vmatmul.mubr.f32.gmra.mxu0 %v306
        %v376 = vpop.f32.mrf.mxu0
        %v377 = vadd.f32 %v302, %v376
        %v378 = vpop.f32.mrf.mxu0
        %379 = vdwg.mxu0
        %v380 = vlaneseq
        %v381 = vand.u32 %v380, 127
        %s382 = smul.u32 %s29, 128
        %v383 = vstv %s382
        %v384 = vadd.s32 %v381, %v383
        %vm385 = vcmp.lt.s32.totalorder %v384, 16
        %v386 = vsel %vm385, %v377, 0.0
        %387 = vadd.xlane.f32.xlu0 %v386
        %v388 = vpop.xlane.xlu0 %387
        %v389 = vrot.slane %v388, 4
        %v390 = vadd.f32 %v388, %v389
        %v391 = vrot.slane %v390, 2
        %v392 = vadd.f32 %v390, %v391
        %v393 = vrot.slane %v392, 1
        %v394 = vadd.f32 %v392, %v393
        %s395 = vtos %v394
        %v396 = vmul.f32 %v386, %v386
        %397 = vadd.xlane.f32.xlu0 %v396
        %v398 = vpop.xlane.xlu0 %397
        %v399 = vrot.slane %v398, 4
        %v400 = vadd.f32 %v398, %v399
        %v401 = vrot.slane %v400, 2
        %v402 = vadd.f32 %v400, %v401
        %v403 = vrot.slane %v402, 1
        %v404 = vadd.f32 %v402, %v403
        %s405 = vtos %v404
        %v406 = vlaneseq
        %v407 = vshrl.u32 %v406, 7
        %vm408 = vcmp.eq.s32.totalorder %v407, 0
        %vm409 = vcmp.eq.s32.totalorder %v381, 0
        %vm410 = vmand %vm408, %vm409
        %vm411 = vcmp.eq.s32.totalorder %v381, 1
        %vm412 = vmand %vm408, %vm411
        %v413 = vstv %s405
        %v414 = vsel %vm412, %v413, 0.0
        %v415 = vstv %s395
        %v416 = vsel %vm410, %v415, %v414
        %417 = vst [vmem:[%s274] sm:$0xff] %v416
        %s418 = sand.u32 %s146, 1
        %s419 = scalar_lea.sflag [#allocation4], %s418
        %s420 = sand.u32 %s146, 1
        %s421 = smul.addr %s420, 8
        %s422 = scalar_lea.vmem [#allocation7], %s421
        // Predicated region
        $region45: #{tpu_custom_call.1} parent=35 // pred_check
          %p423 = pneg %p156
        $region46: #{tpu_custom_call.1} parent=35 // pred_check_branch
          %425 = sbr.rel (%p423) target = $region48
        $region47: #{tpu_custom_call.1} parent=35 // pred_region
          %s427 = ssub.s32 128, 128
          %428 = vsyncadd %s419, %s427
          %s429 = sadd.s32 %s29, %s28
          %s430 = smul.addr %s429, 128
          %s431 = scalar_lea.hbm %s4, %s430
          %s433 = sshll.u32 %s422, 4
          %s434 = int_to_ptr.vmem [resolvable:$true] %s433
          %436 = dma.vmem_to_hbm [thread:$0]  %s434, 128, %s431, %s419
        $region48: #{tpu_custom_call.1} parent=35 // pred_fallthru
          _
      $region36: #{tpu_custom_call.1} parent=5 // pred_fallthru
        _
      %p437 = scmp.le.s32.totalorder 2, %s19
      // Predicated region
      $region49: #{tpu_custom_call.1} parent=5 // pred_check
        %p438 = pneg %p437
      $region50: #{tpu_custom_call.1} parent=5 // pred_check_branch
        %440 = sbr.rel (%p438) target = $region52
      $region51: #{tpu_custom_call.1} parent=5 // pred_region
        %s441 = ssub.s32 %s19, 2
        // Predicated region
        $region53: #{tpu_custom_call.1} parent=51 // pred_check
          %p442 = pneg %p162
        $region54: #{tpu_custom_call.1} parent=51 // pred_check_branch
          %444 = sbr.rel (%p442) target = $region56
        $region55: #{tpu_custom_call.1} parent=51 // pred_region
          %s445 = sand.u32 %s147, 1
          %s446 = scalar_lea.sflag [#allocation4], %s445
          %s447 = sand.u32 %s147, 1
          %s448 = smul.addr %s447, 8
          %s449 = scalar_lea.vmem [#allocation7], %s448
          %450 = dma.done %s446, 128
        $region56: #{tpu_custom_call.1} parent=51 // pred_fallthru
          _
      $region52: #{tpu_custom_call.1} parent=5 // pred_fallthru
        _
    $region6: #{tpu_custom_call.1} parent=1 // loop_footer
      %s23 = sadd.s32 1, %s19
    $region7: #{tpu_custom_call.1} parent=1 // loop_footer_branch
      %18 = sbr.rel target = $region3
    $region8: #{tpu_custom_call.1} parent=1 // loop_exit
      _
    %451 = vsyncpa [#allocation3], 1
    %s452 = scalar_lea.sflag [#allocation3], 1
    %453 = vsyncpa %s452, 1
    %454 = vsyncpa [#allocation6], 1
    %s455 = scalar_lea.sflag [#allocation6], 1
    %456 = vsyncpa %s455, 1
    %457 = vsyncpa [#allocation4], 1
    %s458 = scalar_lea.sflag [#allocation4], 1
    %459 = vsyncpa %s458, 1

</llo_original>
